<compile_context>
chip_gen: v5e
topology: v5e:2x2
jax: 0.10.0
libtpu: 0.0.40
codegen_flags: <defaults>
</compile_context>

<pallas_src>
import functools

import jax
import jax.numpy as jnp
from jax import lax
from jax.experimental import pallas as pl
from jax.experimental.pallas import tpu as pltpu


# ----------------------------------------------------------------------------
# Pallas kernel: one grid step processes `block_b` batch elements end-to-end.
# ----------------------------------------------------------------------------
def _linear_attention_kernel(
    x_ref, wqkv_ref, wo_ref, bqkv_ref, bo_ref, *rest,
    num_heads: int, head_dim: int, mxu_bf16: bool,
    approx_reciprocal: bool, per_head_core: bool,
):
    if per_head_core:
        (o_ref,) = rest
        mask_ref = None
    else:
        mask_ref, o_ref = rest

    H, D = num_heads, head_dim
    C = H * D
    Bb, L, _ = x_ref.shape
    N = Bb * L
    core_dtype = jnp.bfloat16 if mxu_bf16 else jnp.float32

    # ---- Fused QKV projection: one lane-dense (Bb*L, C) x (C, 3C) MXU matmul.
    x = x_ref[...].reshape(N, C).astype(wqkv_ref.dtype)
    qkv = jnp.dot(x, wqkv_ref[...], preferred_element_type=jnp.float32)
    qkv = qkv + bqkv_ref[...].astype(jnp.float32)            # (N, 3C) f32
    q = qkv[:, 0 * C:1 * C]
    k = qkv[:, 1 * C:2 * C]
    v = qkv[:, 2 * C:3 * C]

    def softmax_over_heads(t):
        # Softmax across the H head slices of the channel dim (PyTorch's
        # implicit dim=1 on the (B, H, L, D) view).  Purely row-wise, so it
        # runs on the flattened (Bb*L, C) slab; one reciprocal per softmax.
        heads = [t[:, h * D:(h + 1) * D] for h in range(H)]
        m = heads[0]
        for hh in heads[1:]:
            m = jnp.maximum(m, hh)
        exps = [jnp.exp(hh - m) for hh in heads]
        s = exps[0]
        for e in exps[1:]:
            s = s + e
        inv_s = pl.reciprocal(s, approx=approx_reciprocal)
        return [e * inv_s for e in exps]                      # H x (N, D) f32

    q_heads = softmax_over_heads(q)
    k_heads = softmax_over_heads(k)

    if not per_head_core:
        mask = mask_ref[...]
        mask_f = mask.astype(jnp.float32)                     # (C, C) block-diag
        mask_c = mask.astype(core_dtype)
        q_p_f = jnp.concatenate(q_heads, axis=-1)             # (N, C) f32
        k_p_f = jnp.concatenate(k_heads, axis=-1)
        q_p_c = q_p_f.astype(core_dtype)
        k_p_c = k_p_f.astype(core_dtype)
        v_c = v.astype(core_dtype)

    outs = []   # per-batch (L, C) f32 attention outputs
    for b in range(Bb):          # static unroll; block_b is kept small (<= 8)
        lo, hi = b * L, (b + 1) * L
        if per_head_core:
            # head_dim >= 128: per-head (L,D)x(D,D) matmuls, no H-fold MXU
            # waste, denominator via per-head lane reduction + broadcast.
            head_outs = []
            for h in range(H):
                cl, ch = h * D, (h + 1) * D
                qh_f = q_heads[h][lo:hi, :]                   # (L, D) f32
                kh_f = k_heads[h][lo:hi, :]
                qh = qh_f.astype(core_dtype)
                kh = kh_f.astype(core_dtype)
                vh = v[lo:hi, cl:ch].astype(core_dtype)
                # kv_h[d, e] = sum_l k'[l, d] * v[l, e]  (contract L directly,
                # no explicit transpose op).
                kv_h = lax.dot_general(kh, vh, (((0,), (0,)), ((), ())),
                                       preferred_element_type=jnp.float32)
                num_h = jnp.dot(qh, kv_h.astype(core_dtype),
                                preferred_element_type=jnp.float32)   # (L, D)
                k_sum_h = jnp.sum(kh_f, axis=0, keepdims=True)        # (1, D) f32
                den_h = jnp.sum(qh_f * k_sum_h, axis=-1,
                                keepdims=True) + 1e-6                 # (L, 1) f32
                head_outs.append(
                    num_h * pl.reciprocal(den_h, approx=approx_reciprocal))
            outs.append(jnp.concatenate(head_outs, axis=-1))          # (L, C)
        else:
            # head_dim < 128: lane-dense masked block-diagonal core.  The
            # all-head k'^T v is one MXU matmul; its per-head D x D results
            # are exactly the block-diagonal blocks selected by the mask.
            qb_f = q_p_f[lo:hi, :]
            kb_f = k_p_f[lo:hi, :]
            qb = q_p_c[lo:hi, :]
            kb = k_p_c[lo:hi, :]
            vb = v_c[lo:hi, :]
            kv = lax.dot_general(kb, vb, (((0,), (0,)), ((), ())),
                                 preferred_element_type=jnp.float32)  # (C, C)
            kv = (kv * mask_f).astype(core_dtype)
            num = jnp.dot(qb, kv, preferred_element_type=jnp.float32)  # (L, C)
            # Denominator: the matmul against the block mask both does the
            # per-head reduction and broadcasts it back to that head's
            # channels, keeping everything lane-dense.  f32 k-sum / epsilon.
            k_sum = jnp.sum(kb_f, axis=0, keepdims=True)               # (1, C)
            den = jnp.dot((qb_f * k_sum).astype(core_dtype), mask_c,
                          preferred_element_type=jnp.float32) + 1e-6   # (L, C)
            outs.append(num * pl.reciprocal(den, approx=approx_reciprocal))

    out = outs[0] if Bb == 1 else jnp.concatenate(outs, axis=0)        # (N, C)

    # ---- Output projection; the store is a full-width lane-dense slab.
    o = jnp.dot(out.astype(wo_ref.dtype), wo_ref[...],
                preferred_element_type=jnp.float32)
    o = o + bo_ref[...].astype(jnp.float32)
    o_ref[...] = o.reshape(Bb, L, C).astype(o_ref.dtype)


# ----------------------------------------------------------------------------
# One-time weight packing (outside the hot path).
# ----------------------------------------------------------------------------
def pack_linear_attention_params(params, *, num_heads, dtype=jnp.bfloat16):
    """Pre-transpose weights (y = x @ W^T + b), fuse q/k/v weights & biases,
    store them in `dtype` (bf16 by default so the MXU gets bf16 operands), and
    build the (C, C) block-diagonal head mask used by the head_dim<128 path."""
    C = params["wq"].shape[0]
    assert C % num_heads == 0
    D = C // num_heads
    w_qkv = jnp.concatenate(
        [params["wq"].T, params["wk"].T, params["wv"].T], axis=1)    # (C, 3C)
    b_qkv = jnp.concatenate(
        [params["bq"], params["bk"], params["bv"]]).reshape(1, 3 * C)
    head_id = jnp.arange(C) // D
    mask = (head_id[:, None] == head_id[None, :])
    return {
        "w_qkv": w_qkv.astype(dtype),
        "b_qkv": b_qkv.astype(dtype),
        "wo_t": params["wo"].T.astype(dtype),
        "bo": params["bo"].reshape(1, C).astype(dtype),
        "mask": mask.astype(dtype),
    }


# ----------------------------------------------------------------------------
# Tiling / compiler-parameter helpers.
# ----------------------------------------------------------------------------
def _choose_block_b(B, L, C):
    """How many batch elements each grid step processes (a divisor of B).

    Aim for a few hundred rows per step (amortizes per-step pipeline overhead
    and gives the MXU well-shaped projection matmuls) while bounding per-step
    f32 intermediates and the static per-batch unroll of the attention core."""
    per_batch = 10 * 4 * L * C + 4 * C * C      # activations + kv block (f32)
    max_by_vmem = max(1, (16 * 1024 * 1024) // max(per_batch, 1))
    target = max(1, 512 // max(L, 1))
    limit = max(1, min(max_by_vmem, target, 8))
    bb = 1
    for d in range(1, min(B, limit) + 1):
        if B % d == 0:
            bb = d
    return bb


@functools.lru_cache(maxsize=None)
def _default_vmem_limit_bytes():
    cap = 128 * 1024 * 1024
    try:
        info = pltpu.get_tpu_info()
        reported = int(getattr(info, "vmem_capacity_bytes", cap))
        if reported > 0:
            cap = reported
    except Exception:
        pass
    # ~96 MiB on 128-MiB chips (v5e/v6e), ~48 MiB under v7x's 64 MiB cap.
    return max(32 * 1024 * 1024, min(cap * 3 // 4, 100 * 1024 * 1024))


# ----------------------------------------------------------------------------
# Wrapper
# ----------------------------------------------------------------------------
@functools.partial(
    jax.jit,
    static_argnames=("num_heads", "mxu_bf16", "approx_reciprocal", "block_b"))
def linear_attention(x, packed, *, num_heads, mxu_bf16=True,
                     approx_reciprocal=True, block_b=None):
    B, L, C = x.shape
    assert C % num_heads == 0
    head_dim = C // num_heads
    # head_dim >= 128: skip the masked CxC core (H-fold MXU waste) and drop
    # the mask operand entirely.
    per_head_core = head_dim >= 128

    bb = block_b if block_b is not None else _choose_block_b(B, L, C)
    assert B % bb == 0, (B, bb)

    kernel = functools.partial(
        _linear_attention_kernel,
        num_heads=num_heads, head_dim=head_dim, mxu_bf16=mxu_bf16,
        approx_reciprocal=approx_reciprocal, per_head_core=per_head_core,
    )

    const = lambda b: (0, 0)   # constant blocks: same tile for every grid step
    # Constant-index weight/bias/mask blocks never change across grid steps;
    # once their footprint matters, request single buffering instead of the
    # default double buffering.  (Left off for small C where it is free.)
    const_pipe = pl.Buffered(1) if C >= 512 else None

    def const_spec(shape):
        if const_pipe is None:
            return pl.BlockSpec(shape, const)
        return pl.BlockSpec(shape, const, pipeline_mode=const_pipe)

    in_specs = [
        pl.BlockSpec((bb, L, C), lambda b: (b, 0, 0)),   # x
        const_spec((C, 3 * C)),                          # W_qkv^T (fused)
        const_spec((C, C)),                              # W_o^T
        const_spec((1, 3 * C)),                          # b_qkv (fused)
        const_spec((1, C)),                              # b_o
    ]
    operands = [x, packed["w_qkv"], packed["wo_t"], packed["b_qkv"],
                packed["bo"]]
    if not per_head_core:
        in_specs.append(const_spec((C, C)))              # block-diag head mask
        operands.append(packed["mask"])

    return pl.pallas_call(
        kernel,
        out_shape=jax.ShapeDtypeStruct((B, L, C), x.dtype),
        grid_spec=pltpu.PrefetchScalarGridSpec(
            num_scalar_prefetch=0,
            grid=(B // bb,),
            in_specs=in_specs,
            out_specs=pl.BlockSpec((bb, L, C), lambda b: (b, 0, 0)),
        ),
        compiler_params=pltpu.CompilerParams(
            dimension_semantics=("parallel",),
            vmem_limit_bytes=_default_vmem_limit_bytes(),
        ),
    )(*operands)


# ----------------------------------------------------------------------------
# Pure-JAX reference (mirrors the PyTorch forward, incl. softmax over heads)
# ----------------------------------------------------------------------------
def linear_attention_ref(x, params, *, num_heads):
    with jax.default_matmul_precision("float32"):
        B, L, C = x.shape
        D = C // num_heads
        q = x @ params["wq"].T + params["bq"]
        k = x @ params["wk"].T + params["bk"]
        v = x @ params["wv"].T + params["bv"]

        def split(t):
            return t.reshape(B, L, num_heads, D).transpose(0, 2, 1, 3)  # (B,H,L,D)

        q, k, v = split(q), split(k), split(v)
        q_prime = jax.nn.softmax(q, axis=1)    # PyTorch implicit dim=1 (heads)
        k_prime = jax.nn.softmax(k, axis=1)
        kv = jnp.einsum("bhld,bhle->bhde", k_prime, v)
        out_num = jnp.einsum("bhld,bhde->bhle", q_prime, kv)
        k_prime_sum = k_prime.sum(axis=2)                        # (B,H,D)
        denom = jnp.einsum("bhld,bhd->bhl", q_prime, k_prime_sum) + 1e-6
        out = out_num / denom[..., None]
        out = out.transpose(0, 2, 1, 3).reshape(B, L, C)
        return out @ params["wo"].T + params["bo"]


def init_params(key, channels):
    ks = jax.random.split(key, 8)
    scale = 1.0 / jnp.sqrt(channels)
    def w(k): return jax.random.uniform(k, (channels, channels),
                                        jnp.float32, -scale, scale)
    def b(k): return jax.random.uniform(k, (channels,),
                                        jnp.float32, -scale, scale)
    return {
        "wq": w(ks[0]), "bq": b(ks[1]),
        "wk": w(ks[2]), "bk": b(ks[3]),
        "wv": w(ks[4]), "bv": b(ks[5]),
        "wo": w(ks[6]), "bo": b(ks[7]),
    }


if __name__ == "__main__":
    key = jax.random.PRNGKey(0)
    k_x1, k_p1, k_x2, k_p2 = jax.random.split(key, 4)

    # ---- Test 1: small shape, head_dim < 128 -> masked block-diagonal core.
    B, L, C, H = 2, 8, 32, 4
    x = jax.random.normal(k_x1, (B, L, C), jnp.float32)
    params = init_params(k_p1, C)
    ref = linear_attention_ref(x, params, num_heads=H)

    # Exact path: f32 packed params, f32 MXU operands, exact reciprocal.
    packed_f32 = pack_linear_attention_params(params, num_heads=H,
                                              dtype=jnp.float32)
    out = jax.block_until_ready(
        linear_attention(x, packed_f32, num_heads=H,
                         mxu_bf16=False, approx_reciprocal=False))
    assert out.shape == (B, L, C)
    err = float(jnp.max(jnp.abs(out - ref)))
    assert jnp.allclose(out, ref, rtol=1e-4, atol=1e-4), err

    # Production path: bf16 packed params + bf16 MXU core, approx reciprocal.
    packed_bf16 = pack_linear_attention_params(params, num_heads=H)
    out_fast = jax.block_until_ready(
        linear_attention(x, packed_bf16, num_heads=H))
    err_fast = float(jnp.max(jnp.abs(out_fast - ref)))
    assert jnp.allclose(out_fast, ref, rtol=5e-2, atol=5e-2), err_fast

    # ---- Test 2: head_dim >= 128 -> per-head core (no mask operand).
    B2, L2, C2, H2 = 2, 16, 256, 2
    x2 = jax.random.normal(k_x2, (B2, L2, C2), jnp.float32)
    params2 = init_params(k_p2, C2)
    ref2 = linear_attention_ref(x2, params2, num_heads=H2)

    packed2_f32 = pack_linear_attention_params(params2, num_heads=H2,
                                               dtype=jnp.float32)
    out2 = jax.block_until_ready(
        linear_attention(x2, packed2_f32, num_heads=H2,
                         mxu_bf16=False, approx_reciprocal=False))
    err2 = float(jnp.max(jnp.abs(out2 - ref2)))
    assert jnp.allclose(out2, ref2, rtol=1e-4, atol=1e-4), err2

    packed2_bf16 = pack_linear_attention_params(params2, num_heads=H2)
    out2_fast = jax.block_until_ready(
        linear_attention(x2, packed2_bf16, num_heads=H2))
    err2_fast = float(jnp.max(jnp.abs(out2_fast - ref2)))
    assert jnp.allclose(out2_fast, ref2, rtol=5e-2, atol=5e-2), err2_fast

    print("KERNEL_OK")
</pallas_src>

<mosaic_0001>
module attributes {stable_mosaic.version = 11 : i64} {
  func.func @_linear_attention_kernel(%arg0: i32, %arg1: memref<2x8x32xf32, #tpu.memory_space<vmem>>, %arg2: memref<32x96xf32, #tpu.memory_space<vmem>>, %arg3: memref<32x32xf32, #tpu.memory_space<vmem>>, %arg4: memref<1x96xf32, #tpu.memory_space<vmem>>, %arg5: memref<1x32xf32, #tpu.memory_space<vmem>>, %arg6: memref<32x32xf32, #tpu.memory_space<vmem>>, %arg7: memref<2x8x32xf32, #tpu.memory_space<vmem>>) attributes {dimension_semantics = [#tpu.dimension_semantics<parallel>], iteration_bounds = array<i64: 1>, scalar_prefetch = 0 : i64, scratch_operands = 0 : i64, tpu.core_type = #tpu.core_type<tc>, window_params = [{transform_indices = @transform_0, window_bounds = array<i64: 2, 8, 32>}, {pipeline_mode = #tpu.pipeline_mode<synchronous>, transform_indices = @transform_1, window_bounds = array<i64: 32, 96>}, {pipeline_mode = #tpu.pipeline_mode<synchronous>, transform_indices = @transform_2, window_bounds = array<i64: 32, 32>}, {pipeline_mode = #tpu.pipeline_mode<synchronous>, transform_indices = @transform_3, window_bounds = array<i64: 1, 96>}, {pipeline_mode = #tpu.pipeline_mode<synchronous>, transform_indices = @transform_4, window_bounds = array<i64: 1, 32>}, {pipeline_mode = #tpu.pipeline_mode<synchronous>, transform_indices = @transform_5, window_bounds = array<i64: 32, 32>}, {transform_indices = @transform_6, window_bounds = array<i64: 2, 8, 32>}]} {
    %c0 = arith.constant 0 : index
    %c0_0 = arith.constant 0 : index
    %c0_1 = arith.constant 0 : index
    %0 = vector.load %arg1[%c0, %c0_0, %c0_1] : memref<2x8x32xf32, #tpu.memory_space<vmem>>, vector<2x8x32xf32>
    %1 = vector.shape_cast %0 : vector<2x8x32xf32> to vector<16x32xf32>
    %c0_2 = arith.constant 0 : index
    %c0_3 = arith.constant 0 : index
    %2 = vector.load %arg2[%c0_2, %c0_3] : memref<32x96xf32, #tpu.memory_space<vmem>>, vector<32x96xf32>
    %cst = arith.constant dense<0.000000e+00> : vector<16x96xf32>
    %3 = tpu.matmul %1, %2, %cst {dimension_numbers = #tpu.dot_dimension_numbers<[1], [0], [0], [1], [0, 0, 1, 1], [], []>} : vector<16x32xf32>, vector<32x96xf32>, vector<16x96xf32> -> vector<16x96xf32>
    %c0_4 = arith.constant 0 : index
    %c0_5 = arith.constant 0 : index
    %4 = vector.load %arg4[%c0_4, %c0_5] : memref<1x96xf32, #tpu.memory_space<vmem>>, vector<1x96xf32>
    %5 = vector.broadcast %4 : vector<1x96xf32> to vector<16x96xf32>
    %6 = arith.addf %3, %5 : vector<16x96xf32>
    %7 = vector.extract_strided_slice %6 {offsets = [0, 0], sizes = [16, 32], strides = [1, 1]} : vector<16x96xf32> to vector<16x32xf32>
    %8 = vector.extract_strided_slice %6 {offsets = [0, 32], sizes = [16, 32], strides = [1, 1]} : vector<16x96xf32> to vector<16x32xf32>
    %9 = vector.extract_strided_slice %6 {offsets = [0, 64], sizes = [16, 32], strides = [1, 1]} : vector<16x96xf32> to vector<16x32xf32>
    %10 = vector.extract_strided_slice %7 {offsets = [0, 0], sizes = [16, 8], strides = [1, 1]} : vector<16x32xf32> to vector<16x8xf32>
    %11 = vector.extract_strided_slice %7 {offsets = [0, 8], sizes = [16, 8], strides = [1, 1]} : vector<16x32xf32> to vector<16x8xf32>
    %12 = vector.extract_strided_slice %7 {offsets = [0, 16], sizes = [16, 8], strides = [1, 1]} : vector<16x32xf32> to vector<16x8xf32>
    %13 = vector.extract_strided_slice %7 {offsets = [0, 24], sizes = [16, 8], strides = [1, 1]} : vector<16x32xf32> to vector<16x8xf32>
    %14 = arith.maximumf %10, %11 : vector<16x8xf32>
    %15 = arith.maximumf %14, %12 : vector<16x8xf32>
    %16 = arith.maximumf %15, %13 : vector<16x8xf32>
    %17 = arith.subf %10, %16 : vector<16x8xf32>
    %18 = math.exp %17 : vector<16x8xf32>
    %19 = arith.subf %11, %16 : vector<16x8xf32>
    %20 = math.exp %19 : vector<16x8xf32>
    %21 = arith.subf %12, %16 : vector<16x8xf32>
    %22 = math.exp %21 : vector<16x8xf32>
    %23 = arith.subf %13, %16 : vector<16x8xf32>
    %24 = math.exp %23 : vector<16x8xf32>
    %25 = arith.addf %18, %20 : vector<16x8xf32>
    %26 = arith.addf %25, %22 : vector<16x8xf32>
    %27 = arith.addf %26, %24 : vector<16x8xf32>
    %28 = tpu.reciprocal %27 : vector<16x8xf32> -> vector<16x8xf32>
    %29 = arith.mulf %18, %28 : vector<16x8xf32>
    %30 = arith.mulf %20, %28 : vector<16x8xf32>
    %31 = arith.mulf %22, %28 : vector<16x8xf32>
    %32 = arith.mulf %24, %28 : vector<16x8xf32>
    %33 = vector.extract_strided_slice %8 {offsets = [0, 0], sizes = [16, 8], strides = [1, 1]} : vector<16x32xf32> to vector<16x8xf32>
    %34 = vector.extract_strided_slice %8 {offsets = [0, 8], sizes = [16, 8], strides = [1, 1]} : vector<16x32xf32> to vector<16x8xf32>
    %35 = vector.extract_strided_slice %8 {offsets = [0, 16], sizes = [16, 8], strides = [1, 1]} : vector<16x32xf32> to vector<16x8xf32>
    %36 = vector.extract_strided_slice %8 {offsets = [0, 24], sizes = [16, 8], strides = [1, 1]} : vector<16x32xf32> to vector<16x8xf32>
    %37 = arith.maximumf %33, %34 : vector<16x8xf32>
    %38 = arith.maximumf %37, %35 : vector<16x8xf32>
    %39 = arith.maximumf %38, %36 : vector<16x8xf32>
    %40 = arith.subf %33, %39 : vector<16x8xf32>
    %41 = math.exp %40 : vector<16x8xf32>
    %42 = arith.subf %34, %39 : vector<16x8xf32>
    %43 = math.exp %42 : vector<16x8xf32>
    %44 = arith.subf %35, %39 : vector<16x8xf32>
    %45 = math.exp %44 : vector<16x8xf32>
    %46 = arith.subf %36, %39 : vector<16x8xf32>
    %47 = math.exp %46 : vector<16x8xf32>
    %48 = arith.addf %41, %43 : vector<16x8xf32>
    %49 = arith.addf %48, %45 : vector<16x8xf32>
    %50 = arith.addf %49, %47 : vector<16x8xf32>
    %51 = tpu.reciprocal %50 : vector<16x8xf32> -> vector<16x8xf32>
    %52 = arith.mulf %41, %51 : vector<16x8xf32>
    %53 = arith.mulf %43, %51 : vector<16x8xf32>
    %54 = arith.mulf %45, %51 : vector<16x8xf32>
    %55 = arith.mulf %47, %51 : vector<16x8xf32>
    %c0_6 = arith.constant 0 : index
    %c0_7 = arith.constant 0 : index
    %56 = vector.load %arg6[%c0_6, %c0_7] : memref<32x32xf32, #tpu.memory_space<vmem>>, vector<32x32xf32>
    %57 = tpu.concatenate %29, %30, %31, %32 in 1 : vector<16x8xf32>, vector<16x8xf32>, vector<16x8xf32>, vector<16x8xf32> -> vector<16x32xf32>
    %58 = tpu.concatenate %52, %53, %54, %55 in 1 : vector<16x8xf32>, vector<16x8xf32>, vector<16x8xf32>, vector<16x8xf32> -> vector<16x32xf32>
    %59 = vector.extract_strided_slice %57 {offsets = [0, 0], sizes = [8, 32], strides = [1, 1]} : vector<16x32xf32> to vector<8x32xf32>
    %60 = vector.extract_strided_slice %58 {offsets = [0, 0], sizes = [8, 32], strides = [1, 1]} : vector<16x32xf32> to vector<8x32xf32>
    %61 = vector.extract_strided_slice %57 {offsets = [0, 0], sizes = [8, 32], strides = [1, 1]} : vector<16x32xf32> to vector<8x32xf32>
    %62 = vector.extract_strided_slice %58 {offsets = [0, 0], sizes = [8, 32], strides = [1, 1]} : vector<16x32xf32> to vector<8x32xf32>
    %63 = vector.extract_strided_slice %9 {offsets = [0, 0], sizes = [8, 32], strides = [1, 1]} : vector<16x32xf32> to vector<8x32xf32>
    %cst_8 = arith.constant dense<0.000000e+00> : vector<32x32xf32>
    %64 = tpu.matmul %62, %63, %cst_8 {dimension_numbers = #tpu.dot_dimension_numbers<[0], [0], [1], [1], [0, 1, 1, 1], [], []>} : vector<8x32xf32>, vector<8x32xf32>, vector<32x32xf32> -> vector<32x32xf32>
    %65 = arith.mulf %64, %56 : vector<32x32xf32>
    %cst_9 = arith.constant dense<0.000000e+00> : vector<8x32xf32>
    %66 = tpu.matmul %61, %65, %cst_9 {dimension_numbers = #tpu.dot_dimension_numbers<[1], [0], [0], [1], [0, 0, 1, 1], [], []>} : vector<8x32xf32>, vector<32x32xf32>, vector<8x32xf32> -> vector<8x32xf32>
    %cst_10 = arith.constant dense<0.000000e+00> : vector<32xf32>
    %67 = vector.multi_reduction <add>, %60, %cst_10 [0] : vector<8x32xf32> to vector<32xf32>
    %68 = vector.shape_cast %67 : vector<32xf32> to vector<1x32xf32>
    %69 = vector.broadcast %68 : vector<1x32xf32> to vector<8x32xf32>
    %70 = arith.mulf %59, %69 : vector<8x32xf32>
    %cst_11 = arith.constant dense<0.000000e+00> : vector<8x32xf32>
    %71 = tpu.matmul %70, %56, %cst_11 {dimension_numbers = #tpu.dot_dimension_numbers<[1], [0], [0], [1], [0, 0, 1, 1], [], []>} : vector<8x32xf32>, vector<32x32xf32>, vector<8x32xf32> -> vector<8x32xf32>
    %cst_12 = arith.constant 9.99999997E-7 : f32
    %72 = vector.broadcast %cst_12 : f32 to vector<8x32xf32>
    %73 = arith.addf %71, %72 : vector<8x32xf32>
    %74 = tpu.reciprocal %73 : vector<8x32xf32> -> vector<8x32xf32>
    %75 = arith.mulf %66, %74 : vector<8x32xf32>
    %76 = vector.extract_strided_slice %57 {offsets = [8, 0], sizes = [8, 32], strides = [1, 1]} : vector<16x32xf32> to vector<8x32xf32>
    %77 = vector.extract_strided_slice %58 {offsets = [8, 0], sizes = [8, 32], strides = [1, 1]} : vector<16x32xf32> to vector<8x32xf32>
    %78 = vector.extract_strided_slice %57 {offsets = [8, 0], sizes = [8, 32], strides = [1, 1]} : vector<16x32xf32> to vector<8x32xf32>
    %79 = vector.extract_strided_slice %58 {offsets = [8, 0], sizes = [8, 32], strides = [1, 1]} : vector<16x32xf32> to vector<8x32xf32>
    %80 = vector.extract_strided_slice %9 {offsets = [8, 0], sizes = [8, 32], strides = [1, 1]} : vector<16x32xf32> to vector<8x32xf32>
    %cst_13 = arith.constant dense<0.000000e+00> : vector<32x32xf32>
    %81 = tpu.matmul %79, %80, %cst_13 {dimension_numbers = #tpu.dot_dimension_numbers<[0], [0], [1], [1], [0, 1, 1, 1], [], []>} : vector<8x32xf32>, vector<8x32xf32>, vector<32x32xf32> -> vector<32x32xf32>
    %82 = arith.mulf %81, %56 : vector<32x32xf32>
    %cst_14 = arith.constant dense<0.000000e+00> : vector<8x32xf32>
    %83 = tpu.matmul %78, %82, %cst_14 {dimension_numbers = #tpu.dot_dimension_numbers<[1], [0], [0], [1], [0, 0, 1, 1], [], []>} : vector<8x32xf32>, vector<32x32xf32>, vector<8x32xf32> -> vector<8x32xf32>
    %cst_15 = arith.constant dense<0.000000e+00> : vector<32xf32>
    %84 = vector.multi_reduction <add>, %77, %cst_15 [0] : vector<8x32xf32> to vector<32xf32>
    %85 = vector.shape_cast %84 : vector<32xf32> to vector<1x32xf32>
    %86 = vector.broadcast %85 : vector<1x32xf32> to vector<8x32xf32>
    %87 = arith.mulf %76, %86 : vector<8x32xf32>
    %cst_16 = arith.constant dense<0.000000e+00> : vector<8x32xf32>
    %88 = tpu.matmul %87, %56, %cst_16 {dimension_numbers = #tpu.dot_dimension_numbers<[1], [0], [0], [1], [0, 0, 1, 1], [], []>} : vector<8x32xf32>, vector<32x32xf32>, vector<8x32xf32> -> vector<8x32xf32>
    %cst_17 = arith.constant 9.99999997E-7 : f32
    %89 = vector.broadcast %cst_17 : f32 to vector<8x32xf32>
    %90 = arith.addf %88, %89 : vector<8x32xf32>
    %91 = tpu.reciprocal %90 : vector<8x32xf32> -> vector<8x32xf32>
    %92 = arith.mulf %83, %91 : vector<8x32xf32>
    %93 = tpu.concatenate %75, %92 in 0 : vector<8x32xf32>, vector<8x32xf32> -> vector<16x32xf32>
    %c0_18 = arith.constant 0 : index
    %c0_19 = arith.constant 0 : index
    %94 = vector.load %arg3[%c0_18, %c0_19] : memref<32x32xf32, #tpu.memory_space<vmem>>, vector<32x32xf32>
    %cst_20 = arith.constant dense<0.000000e+00> : vector<16x32xf32>
    %95 = tpu.matmul %93, %94, %cst_20 {dimension_numbers = #tpu.dot_dimension_numbers<[1], [0], [0], [1], [0, 0, 1, 1], [], []>} : vector<16x32xf32>, vector<32x32xf32>, vector<16x32xf32> -> vector<16x32xf32>
    %c0_21 = arith.constant 0 : index
    %c0_22 = arith.constant 0 : index
    %96 = vector.load %arg5[%c0_21, %c0_22] : memref<1x32xf32, #tpu.memory_space<vmem>>, vector<1x32xf32>
    %97 = vector.broadcast %96 : vector<1x32xf32> to vector<16x32xf32>
    %98 = arith.addf %95, %97 : vector<16x32xf32>
    %99 = vector.shape_cast %98 : vector<16x32xf32> to vector<2x8x32xf32>
    %c0_23 = arith.constant 0 : index
    %c0_24 = arith.constant 0 : index
    %c0_25 = arith.constant 0 : index
    %100 = vector.load %arg7[%c0_23, %c0_24, %c0_25] : memref<2x8x32xf32, #tpu.memory_space<vmem>>, vector<2x8x32xf32>
    tpu.vector_store %arg7[%c0_23, %c0_24, %c0_25], %99 {strides = array<i32>} : memref<2x8x32xf32, #tpu.memory_space<vmem>>, vector<2x8x32xf32>,
    return
  }
  func.func @transform_0(%arg0: i32) -> (i32, i32, i32) {
    %c0_i32 = arith.constant 0 : i32
    %c0_i32_0 = arith.constant 0 : i32
    %c0_i32_1 = arith.constant 0 : i32
    return %arg0, %c0_i32, %c0_i32_0 : i32, i32, i32
  }
  func.func @transform_1(%arg0: i32) -> (i32, i32) {
    %c0_i32 = arith.constant 0 : i32
    %c0_i32_0 = arith.constant 0 : i32
    %c0_i32_1 = arith.constant 0 : i32
    return %c0_i32, %c0_i32_0 : i32, i32
  }
  func.func @transform_2(%arg0: i32) -> (i32, i32) {
    %c0_i32 = arith.constant 0 : i32
    %c0_i32_0 = arith.constant 0 : i32
    %c0_i32_1 = arith.constant 0 : i32
    return %c0_i32, %c0_i32_0 : i32, i32
  }
  func.func @transform_3(%arg0: i32) -> (i32, i32) {
    %c0_i32 = arith.constant 0 : i32
    %c0_i32_0 = arith.constant 0 : i32
    %c0_i32_1 = arith.constant 0 : i32
    return %c0_i32, %c0_i32_0 : i32, i32
  }
  func.func @transform_4(%arg0: i32) -> (i32, i32) {
    %c0_i32 = arith.constant 0 : i32
    %c0_i32_0 = arith.constant 0 : i32
    %c0_i32_1 = arith.constant 0 : i32
    return %c0_i32, %c0_i32_0 : i32, i32
  }
  func.func @transform_5(%arg0: i32) -> (i32, i32) {
    %c0_i32 = arith.constant 0 : i32
    %c0_i32_0 = arith.constant 0 : i32
    %c0_i32_1 = arith.constant 0 : i32
    return %c0_i32, %c0_i32_0 : i32, i32
  }
  func.func @transform_6(%arg0: i32) -> (i32, i32, i32) {
    %c0_i32 = arith.constant 0 : i32
    %c0_i32_0 = arith.constant 0 : i32
    %c0_i32_1 = arith.constant 0 : i32
    return %arg0, %c0_i32, %c0_i32_0 : i32, i32, i32
  }
}

</mosaic_0001>

<llo_original>
// kernel: linear_attention.1
$region0: #{linear_attention.1}
  #allocation0 [shape = 'u32[]', space=smem, size = 0x4, offset = 0x4, fixed_abs, tag = 'smem constant byte address 0x4 - core index']
  #allocation1 [shape = 'u32[72,128]{1,0:T(1,128)}', space=vmem, size = 0x9000, scoped, tag = 'internal scratch']
  %s0 = inlined_call_operand.hbm [shape: f32[2,8,32], index: 0, kind: input, shape index: {}]
  %s1 = inlined_call_operand.hbm [shape: f32[32,96], index: 1, kind: input, shape index: {}]
  %s2 = inlined_call_operand.hbm [shape: f32[32,32], index: 2, kind: input, shape index: {}]
  %s3 = inlined_call_operand.hbm [shape: f32[1,96], index: 3, kind: input, shape index: {}]
  %s4 = inlined_call_operand.vmem [shape: f32[1,32], index: 4, kind: input, shape index: {}]
  %s5 = inlined_call_operand.hbm [shape: f32[32,32], index: 5, kind: input, shape index: {}]
  %s6 = inlined_call_operand.hbm [shape: f32[2,8,32], index: 6, kind: output, shape index: {}]
  %s7 = sld [smem:[#allocation0]]
  $region54: #{linear_attention.1} parent=0
    _
  %s9 = ssub.s32 1, %s7
  %s10 = scalar_select 0, %s9, %s7
  $region1: #{linear_attention.1} parent=0
    #allocation2 [shape = 'u8[8192]{0}', space=vmem, size = 0x2000, scoped, tag = 'input window, operand 0, single buffered']
    #allocation3 [shape = 's32[1]{0}', space=sflag, size = 0x4, scoped, tag = 'scoped memory for linear_attention.1']
    #allocation4 [shape = 's32[1]{0}', space=sflag, size = 0x4, scoped, tag = 'scoped memory for linear_attention.1']
    #allocation5 [shape = 'u8[16384]{0}', space=vmem, size = 0x4000, scoped, tag = 'input window, operand 1, single buffered']
    #allocation6 [shape = 's32[1]{0}', space=sflag, size = 0x4, scoped, tag = 'scoped memory for linear_attention.1']
    #allocation7 [shape = 'u8[16384]{0}', space=vmem, size = 0x4000, scoped, tag = 'input window, operand 2, single buffered']
    #allocation8 [shape = 'u8[512]{0}', space=vmem, size = 0x400, scoped, tag = 'input window, operand 3, single buffered']
    #allocation9 [shape = 's32[1]{0}', space=sflag, size = 0x4, scoped, tag = 'scoped memory for linear_attention.1']
    #allocation10 [shape = 'u8[16384]{0}', space=vmem, size = 0x4000, scoped, tag = 'input window, operand 5, single buffered']
    #allocation11 [shape = 'u8[8192]{0}', space=vmem, size = 0x2000, scoped, tag = 'output window, operand 0, single buffered']
    %11 = vsyncpa [#allocation3], 0
    %12 = vsyncpa [#allocation6], 0
    %13 = vsyncpa [#allocation9], 0
    %14 = vsyncpa [#allocation4], 0
    // Predicated region
    $region2: #{linear_attention.1} parent=1 // pred_check
      _
    $region3: #{linear_attention.1} parent=1 // pred_check_branch
      %16 = sbr.rel (0) target = $region5
    $region4: #{linear_attention.1} parent=1 // pred_region
      %18 = vsyncadd [#allocation3], 0
      %s19 = sshll.u32 %s0, 4
      %s20 = int_to_ptr.hbm [resolvable:$true] %s19
      %s21 = sshll.u32 [#allocation2], 4
      %s22 = int_to_ptr.vmem [resolvable:$true] %s21
      %27 = dma.hbm_to_vmem [thread:$0]  %s20, 256, %s22, [#allocation3], 128, 128, 8
    $region5: #{linear_attention.1} parent=1 // pred_fallthru
      _
    // Predicated region
    $region6: #{linear_attention.1} parent=1 // pred_check
      _
    $region7: #{linear_attention.1} parent=1 // pred_check_branch
      %29 = sbr.rel (0) target = $region9
    $region8: #{linear_attention.1} parent=1 // pred_region
      %31 = vsyncadd [#allocation6], 0
      %s32 = sshll.u32 %s1, 4
      %s33 = int_to_ptr.hbm [resolvable:$true] %s32
      %s34 = sshll.u32 [#allocation5], 4
      %s35 = int_to_ptr.vmem [resolvable:$true] %s34
      %40 = dma.hbm_to_vmem [thread:$0]  %s33, 512, %s35, [#allocation6], 128, 128, 8
    $region9: #{linear_attention.1} parent=1 // pred_fallthru
      _
    // Predicated region
    $region10: #{linear_attention.1} parent=1 // pred_check
      _
    $region11: #{linear_attention.1} parent=1 // pred_check_branch
      %42 = sbr.rel (0) target = $region13
    $region12: #{linear_attention.1} parent=1 // pred_region
      %44 = vsyncadd [#allocation6], 0
      %s45 = sshll.u32 %s2, 4
      %s46 = int_to_ptr.hbm [resolvable:$true] %s45
      %s47 = sshll.u32 [#allocation7], 4
      %s48 = int_to_ptr.vmem [resolvable:$true] %s47
      %53 = dma.hbm_to_vmem [thread:$0]  %s46, 512, %s48, [#allocation6], 128, 128, 8
    $region13: #{linear_attention.1} parent=1 // pred_fallthru
      _
    // Predicated region
    $region14: #{linear_attention.1} parent=1 // pred_check
      _
    $region15: #{linear_attention.1} parent=1 // pred_check_branch
      %55 = sbr.rel (0) target = $region17
    $region16: #{linear_attention.1} parent=1 // pred_region
      %57 = vsyncadd [#allocation9], 0
      %s59 = sshll.u32 %s3, 4
      %s60 = int_to_ptr.hbm [resolvable:$true] %s59
      %s61 = sshll.u32 [#allocation8], 4
      %s62 = int_to_ptr.vmem [resolvable:$true] %s61
      %64 = dma.hbm_to_vmem [thread:$0]  %s60, 16, %s62, [#allocation9]
    $region17: #{linear_attention.1} parent=1 // pred_fallthru
      _
    // Predicated region
    $region18: #{linear_attention.1} parent=1 // pred_check
      _
    $region19: #{linear_attention.1} parent=1 // pred_check_branch
      %66 = sbr.rel (0) target = $region21
    $region20: #{linear_attention.1} parent=1 // pred_region
      _
    $region21: #{linear_attention.1} parent=1 // pred_fallthru
      _
    // Predicated region
    $region22: #{linear_attention.1} parent=1 // pred_check
      _
    $region23: #{linear_attention.1} parent=1 // pred_check_branch
      %68 = sbr.rel (0) target = $region25
    $region24: #{linear_attention.1} parent=1 // pred_region
      %70 = vsyncadd [#allocation9], 0
      %s71 = sshll.u32 %s5, 4
      %s72 = int_to_ptr.hbm [resolvable:$true] %s71
      %s73 = sshll.u32 [#allocation10], 4
      %s74 = int_to_ptr.vmem [resolvable:$true] %s73
      %79 = dma.hbm_to_vmem [thread:$0]  %s72, 512, %s74, [#allocation9], 128, 128, 8
    $region25: #{linear_attention.1} parent=1 // pred_fallthru
      _
    // Predicated region
    $region26: #{linear_attention.1} parent=1 // pred_check
      _
    $region27: #{linear_attention.1} parent=1 // pred_check_branch
      %81 = sbr.rel (0) target = $region29
    $region28: #{linear_attention.1} parent=1 // pred_region
      %83 = dma.done [#allocation3], 256
    $region29: #{linear_attention.1} parent=1 // pred_fallthru
      _
    // Predicated region
    $region30: #{linear_attention.1} parent=1 // pred_check
      _
    $region31: #{linear_attention.1} parent=1 // pred_check_branch
      %85 = sbr.rel (0) target = $region33
    $region32: #{linear_attention.1} parent=1 // pred_region
      %87 = dma.done [#allocation6], 512
    $region33: #{linear_attention.1} parent=1 // pred_fallthru
      _
    // Predicated region
    $region34: #{linear_attention.1} parent=1 // pred_check
      _
    $region35: #{linear_attention.1} parent=1 // pred_check_branch
      %89 = sbr.rel (0) target = $region37
    $region36: #{linear_attention.1} parent=1 // pred_region
      %91 = dma.done [#allocation6], 512
    $region37: #{linear_attention.1} parent=1 // pred_fallthru
      _
    // Predicated region
    $region38: #{linear_attention.1} parent=1 // pred_check
      _
    $region39: #{linear_attention.1} parent=1 // pred_check_branch
      %93 = sbr.rel (0) target = $region41
    $region40: #{linear_attention.1} parent=1 // pred_region
      %95 = dma.done [#allocation9], 16
    $region41: #{linear_attention.1} parent=1 // pred_fallthru
      _
    // Predicated region
    $region42: #{linear_attention.1} parent=1 // pred_check
      _
    $region43: #{linear_attention.1} parent=1 // pred_check_branch
      %97 = sbr.rel (0) target = $region45
    $region44: #{linear_attention.1} parent=1 // pred_region
      %99 = dma.done [#allocation9], 512
    $region45: #{linear_attention.1} parent=1 // pred_fallthru
      _
    %v100 = vld [vmem:[#allocation2] sm:$0xff]
    %v101 = vld [vmem:[#allocation2 + $0x8] sm:$0xff]
    %v102 = vld [vmem:[#allocation5] sm:$0xff]
    %v103 = vld [vmem:[#allocation5 + $0x8] sm:$0xff]
    %v104 = vld [vmem:[#allocation5 + $0x10] sm:$0xff]
    %v105 = vld [vmem:[#allocation5 + $0x18] sm:$0xff]
    %v106 = vld [vmem:[#allocation8] sm:$0x1]
    %v108 = vperm.slane %v106, 0
    %vm110 = vcmask 261120
    %v112 = vsel %vm110, %v100, 0
    %v115 = vsel %vm110, %v101, 0
    %117 = vmatpush.msra.mxu0 0.0
    %118 = vmatpush.msra.mxu0 0.0
    %119 = vmatpush.msra.mxu0 0.0
    %120 = vmatpush.msra.mxu0 0.0
    %121 = vmatpush.msra.mxu0 0.0
    %122 = vmatpush.msra.mxu0 0.0
    %123 = vmatpush.msra.mxu0 0.0
    %124 = vmatpush.msra.mxu0 0.0
    %125 = vmatpush.msra.mxu0 0.0
    %126 = vmatpush.msra.mxu0 0.0
    %127 = vmatpush.msra.mxu0 0.0
    %128 = vmatpush.msra.mxu0 0.0
    %129 = vmatpush.msra.mxu0 %v105
    %130 = vmatpush.msra.mxu0 %v104
    %131 = vmatpush.msra.mxu0 %v103
    %132 = vmatpush.msra.mxu0 %v102
    %133 = vmatmul.f32.gmra.mxu0 %v112
    %v134 = vpop.f32.mrf.mxu0
    %v135 = vadd.f32 %v108, %v134
    %136 = vmatmul.f32.gmra.mxu0 %v115
    %v137 = vpop.f32.mrf.mxu0
    %v138 = vadd.f32 %v108, %v137
    %139 = vdwg.mxu0
    %142 = vrot.lane.b32.xlu0 %v135, 120
    %v143 = vpop.permute.xlu0 %142
    %144 = vrot.lane.b32.xlu0 %v138, 120
    %v145 = vpop.permute.xlu0 %144
    %v148 = vmax.f32 %v135, %v143
    %v149 = vmax.f32 %v138, %v145
    %150 = vrot.lane.b32.xlu0 %v135, 112
    %v151 = vpop.permute.xlu0 %150
    %152 = vrot.lane.b32.xlu0 %v138, 112
    %v153 = vpop.permute.xlu0 %152
    %v156 = vmax.f32 %v148, %v151
    %v157 = vmax.f32 %v149, %v153
    %158 = vrot.lane.b32.xlu0 %v135, 104
    %v159 = vpop.permute.xlu0 %158
    %160 = vrot.lane.b32.xlu0 %v138, 104
    %v161 = vpop.permute.xlu0 %160
    %v164 = vmax.f32 %v156, %v159
    %v165 = vmax.f32 %v157, %v161
    %v166 = vsub.f32 %v135, %v164
    %v167 = vsub.f32 %v138, %v165
    %v168 = vmul.f32 %v166, 1.442695
    %v169 = vpow.pop %v168
    %v170 = vmul.f32 %v167, 1.442695
    %v171 = vpow.pop %v170
    %174 = vrot.lane.b32.xlu0 %v164, 8
    %v175 = vpop.permute.xlu0 %174
    %176 = vrot.lane.b32.xlu0 %v165, 8
    %v177 = vpop.permute.xlu0 %176
    %v180 = vsub.f32 %v135, %v175
    %v181 = vsub.f32 %v138, %v177
    %v182 = vmul.f32 %v180, 1.442695
    %v183 = vpow.pop %v182
    %v184 = vmul.f32 %v181, 1.442695
    %v185 = vpow.pop %v184
    %186 = vrot.lane.b32.xlu0 %v164, 16
    %v187 = vpop.permute.xlu0 %186
    %188 = vrot.lane.b32.xlu0 %v165, 16
    %v189 = vpop.permute.xlu0 %188
    %v192 = vsub.f32 %v135, %v187
    %v193 = vsub.f32 %v138, %v189
    %v194 = vmul.f32 %v192, 1.442695
    %v195 = vpow.pop %v194
    %v196 = vmul.f32 %v193, 1.442695
    %v197 = vpow.pop %v196
    %198 = vrot.lane.b32.xlu0 %v164, 24
    %v199 = vpop.permute.xlu0 %198
    %200 = vrot.lane.b32.xlu0 %v165, 24
    %v201 = vpop.permute.xlu0 %200
    %v204 = vsub.f32 %v135, %v199
    %v205 = vsub.f32 %v138, %v201
    %v206 = vmul.f32 %v204, 1.442695
    %v207 = vpow.pop %v206
    %v208 = vmul.f32 %v205, 1.442695
    %v209 = vpow.pop %v208
    %212 = vrot.lane.b32.xlu0 %v183, 120
    %v213 = vpop.permute.xlu0 %212
    %214 = vrot.lane.b32.xlu0 %v185, 120
    %v215 = vpop.permute.xlu0 %214
    %v218 = vadd.f32 %v169, %v213
    %v219 = vadd.f32 %v171, %v215
    %222 = vrot.lane.b32.xlu0 %v195, 112
    %v223 = vpop.permute.xlu0 %222
    %224 = vrot.lane.b32.xlu0 %v197, 112
    %v225 = vpop.permute.xlu0 %224
    %v228 = vadd.f32 %v218, %v223
    %v229 = vadd.f32 %v219, %v225
    %232 = vrot.lane.b32.xlu0 %v207, 104
    %v233 = vpop.permute.xlu0 %232
    %234 = vrot.lane.b32.xlu0 %v209, 104
    %v235 = vpop.permute.xlu0 %234
    %v238 = vadd.f32 %v228, %v233
    %v239 = vadd.f32 %v229, %v235
    %v240 = vrcp.pop %v238
    %v241 = vmul.f32 %v238, %v240
    %v242 = vsub.f32 1.0, %v241
    %v243 = vmul.f32 %v240, %v242
    %v244 = vadd.f32 %v240, %v243
    %vm245 = vweird.f32 %v238
    %vm246 = vweird.f32 %v240
    %vm247 = vmor %vm245, %vm246
    %v248 = vsel %vm247, %v240, %v244
    %v249 = vand.u32 2147483647, %v238
    %vm250 = vcmp.eq.f32.partialorder %v249, 8.507059e+37
    %v251 = vand.u32 %v238, 2147483648
    %v252 = vor.u32 1.1754944e-38, %v251
    %v253 = vsel %vm250, %v252, %v248
    %v254 = vrcp.pop %v239
    %v255 = vmul.f32 %v239, %v254
    %v256 = vsub.f32 1.0, %v255
    %v257 = vmul.f32 %v254, %v256
    %v258 = vadd.f32 %v254, %v257
    %vm259 = vweird.f32 %v239
    %vm260 = vweird.f32 %v254
    %vm261 = vmor %vm259, %vm260
    %v262 = vsel %vm261, %v254, %v258
    %v263 = vand.u32 2147483647, %v239
    %vm264 = vcmp.eq.f32.partialorder %v263, 8.507059e+37
    %v265 = vand.u32 %v239, 2147483648
    %v266 = vor.u32 1.1754944e-38, %v265
    %v267 = vsel %vm264, %v266, %v262
    %v268 = vmul.f32 %v169, %v253
    %v269 = vmul.f32 %v171, %v267
    %272 = vrot.lane.b32.xlu0 %v253, 8
    %v273 = vpop.permute.xlu0 %272
    %274 = vrot.lane.b32.xlu0 %v267, 8
    %v275 = vpop.permute.xlu0 %274
    %v278 = vmul.f32 %v183, %v273
    %v279 = vmul.f32 %v185, %v275
    %280 = vrot.lane.b32.xlu0 %v253, 16
    %v281 = vpop.permute.xlu0 %280
    %282 = vrot.lane.b32.xlu0 %v267, 16
    %v283 = vpop.permute.xlu0 %282
    %v286 = vmul.f32 %v195, %v281
    %v287 = vmul.f32 %v197, %v283
    %288 = vrot.lane.b32.xlu0 %v253, 24
    %v289 = vpop.permute.xlu0 %288
    %290 = vrot.lane.b32.xlu0 %v267, 24
    %v291 = vpop.permute.xlu0 %290
    %v294 = vmul.f32 %v207, %v289
    %v295 = vmul.f32 %v209, %v291
    %v296 = vld [vmem:[#allocation10] sm:$0xff]
    %v297 = vld [vmem:[#allocation10 + $0x8] sm:$0xff]
    %v298 = vld [vmem:[#allocation10 + $0x10] sm:$0xff]
    %v299 = vld [vmem:[#allocation10 + $0x18] sm:$0xff]
    %vm300 = vcmask 64512
    %v301 = vsel %vm300, %v268, %v278
    %v302 = vsel %vm300, %v269, %v279
    %vm303 = vcmask 130048
    %v304 = vsel %vm303, %v301, %v286
    %v305 = vsel %vm303, %v302, %v287
    %vm306 = vcmask 195584
    %v307 = vsel %vm306, %v304, %v294
    %v308 = vsel %vm306, %v305, %v295
    %311 = vrot.lane.b32.xlu0 %v268, 96
    %v312 = vpop.permute.xlu0 %311
    %313 = vrot.lane.b32.xlu0 %v269, 96
    %v314 = vpop.permute.xlu0 %313
    %319 = vrot.lane.b32.xlu0 %v278, 96
    %v320 = vpop.permute.xlu0 %319
    %321 = vrot.lane.b32.xlu0 %v279, 96
    %v322 = vpop.permute.xlu0 %321
    %327 = vrot.lane.b32.xlu0 %v286, 96
    %v328 = vpop.permute.xlu0 %327
    %329 = vrot.lane.b32.xlu0 %v287, 96
    %v330 = vpop.permute.xlu0 %329
    %335 = vrot.lane.b32.xlu0 %v294, 96
    %v336 = vpop.permute.xlu0 %335
    %337 = vrot.lane.b32.xlu0 %v295, 96
    %v338 = vpop.permute.xlu0 %337
    %v341 = vsel %vm300, %v312, %v320
    %v342 = vsel %vm300, %v314, %v322
    %v343 = vsel %vm303, %v341, %v328
    %v344 = vsel %vm303, %v342, %v330
    %v345 = vsel %vm306, %v343, %v336
    %v346 = vsel %vm306, %v344, %v338
    %347 = vxpose.xlu0.b32.start [1/16] %v345, 128
    %348 = vxpose.xlu0.b32.cont [2/16] 0.0, 128
    %349 = vxpose.xlu0.b32.cont [3/16] 0.0, 128
    %350 = vxpose.xlu0.b32.cont [4/16] 0.0, 128
    %351 = vxpose.xlu0.b32.cont [5/16] 0.0, 128
    %352 = vxpose.xlu0.b32.cont [6/16] 0.0, 128
    %353 = vxpose.xlu0.b32.cont [7/16] 0.0, 128
    %354 = vxpose.xlu0.b32.cont [8/16] 0.0, 128
    %355 = vxpose.xlu0.b32.cont [9/16] 0.0, 128
    %356 = vxpose.xlu0.b32.cont [10/16] 0.0, 128
    %357 = vxpose.xlu0.b32.cont [11/16] 0.0, 128
    %358 = vxpose.xlu0.b32.cont [12/16] 0.0, 128
    %359 = vxpose.xlu0.b32.cont [13/16] 0.0, 128
    %360 = vxpose.xlu0.b32.cont [14/16] 0.0, 128
    %361 = vxpose.xlu0.b32.cont [15/16] 0.0, 128
    %362 = vxpose.xlu0.b32.end [16/16] 0.0, 128
    %v363 = vpop.trf.xlu0
    %v364 = vpop.trf.xlu0
    %v365 = vpop.trf.xlu0
    %v366 = vpop.trf.xlu0
    %v367 = vpop.trf.xlu0
    %v368 = vpop.trf.xlu0
    %v369 = vpop.trf.xlu0
    %v370 = vpop.trf.xlu0
    %v371 = vpop.trf.xlu0
    %v372 = vpop.trf.xlu0
    %v373 = vpop.trf.xlu0
    %v374 = vpop.trf.xlu0
    %v375 = vpop.trf.xlu0
    %v376 = vpop.trf.xlu0
    %v377 = vpop.trf.xlu0
    %v378 = vpop.trf.xlu0
    %379 = vrot.lane.b32.xlu0 %v135, 64
    %v380 = vpop.permute.xlu0 %379
    %v383 = vsel %vm300, %v363, 0
    %v386 = vsel %vm300, %v364, 0
    %v389 = vsel %vm300, %v365, 0
    %v392 = vsel %vm300, %v366, 0
    %394 = vmatpush.msra.mxu0 0.0
    %395 = vmatpush.msra.mxu0 0.0
    %396 = vmatpush.msra.mxu0 0.0
    %397 = vmatpush.msra.mxu0 0.0
    %398 = vmatpush.msra.mxu0 0.0
    %399 = vmatpush.msra.mxu0 0.0
    %400 = vmatpush.msra.mxu0 0.0
    %401 = vmatpush.msra.mxu0 0.0
    %402 = vmatpush.msra.mxu0 0.0
    %403 = vmatpush.msra.mxu0 0.0
    %404 = vmatpush.msra.mxu0 0.0
    %405 = vmatpush.msra.mxu0 0.0
    %406 = vmatpush.msra.mxu0 0.0
    %407 = vmatpush.msra.mxu0 0.0
    %408 = vmatpush.msra.mxu0 0.0
    %409 = vmatpush.msra.mxu0 %v380
    %410 = vmatmul.f32.gmra.mxu0 %v383
    %v411 = vpop.f32.mrf.mxu0
    %v412 = vadd.f32 0.0, %v411
    %413 = vmatmul.f32.gmra.mxu0 %v386
    %v414 = vpop.f32.mrf.mxu0
    %v415 = vadd.f32 0.0, %v414
    %416 = vmatmul.f32.gmra.mxu0 %v389
    %v417 = vpop.f32.mrf.mxu0
    %v418 = vadd.f32 0.0, %v417
    %419 = vmatmul.f32.gmra.mxu0 %v392
    %v420 = vpop.f32.mrf.mxu0
    %v421 = vadd.f32 0.0, %v420
    %422 = vdwg.mxu0
    %v423 = vmul.f32 %v412, %v296
    %v424 = vmul.f32 %v415, %v297
    %v425 = vmul.f32 %v418, %v298
    %v426 = vmul.f32 %v421, %v299
    %v428 = vsel %vm110, %v307, 0
    %430 = vmatpush.msra.mxu0 0.0
    %431 = vmatpush.msra.mxu0 0.0
    %432 = vmatpush.msra.mxu0 0.0
    %433 = vmatpush.msra.mxu0 0.0
    %434 = vmatpush.msra.mxu0 0.0
    %435 = vmatpush.msra.mxu0 0.0
    %436 = vmatpush.msra.mxu0 0.0
    %437 = vmatpush.msra.mxu0 0.0
    %438 = vmatpush.msra.mxu0 0.0
    %439 = vmatpush.msra.mxu0 0.0
    %440 = vmatpush.msra.mxu0 0.0
    %441 = vmatpush.msra.mxu0 0.0
    %442 = vmatpush.msra.mxu0 %v426
    %443 = vmatpush.msra.mxu0 %v425
    %444 = vmatpush.msra.mxu0 %v424
    %445 = vmatpush.msra.mxu0 %v423
    %446 = vmatmul.f32.gmra.mxu0 %v428
    %v447 = vpop.f32.mrf.mxu0
    %v448 = vadd.f32 0.0, %v447
    %449 = vdwg.mxu0
    %v450 = vsel %vm110, %v345, 0.0
    %v451 = vrot.slane %v450, 4
    %v452 = vadd.f32 %v450, %v451
    %v453 = vrot.slane %v452, 2
    %v454 = vadd.f32 %v452, %v453
    %v455 = vrot.slane %v454, 1
    %v456 = vadd.f32 %v454, %v455
    %v457 = vmul.f32 %v307, %v456
    %v459 = vsel %vm110, %v457, 0
    %461 = vmatpush.msra.mxu0 0.0
    %462 = vmatpush.msra.mxu0 0.0
    %463 = vmatpush.msra.mxu0 0.0
    %464 = vmatpush.msra.mxu0 0.0
    %465 = vmatpush.msra.mxu0 0.0
    %466 = vmatpush.msra.mxu0 0.0
    %467 = vmatpush.msra.mxu0 0.0
    %468 = vmatpush.msra.mxu0 0.0
    %469 = vmatpush.msra.mxu0 0.0
    %470 = vmatpush.msra.mxu0 0.0
    %471 = vmatpush.msra.mxu0 0.0
    %472 = vmatpush.msra.mxu0 0.0
    %473 = vmatpush.msra.mxu0 %v299
    %474 = vmatpush.msra.mxu0 %v298
    %475 = vmatpush.msra.mxu0 %v297
    %476 = vmatpush.msra.mxu0 %v296
    %477 = vmatmul.f32.gmra.mxu0 %v459
    %v478 = vpop.f32.mrf.mxu0
    %v479 = vadd.f32 1e-06, %v478
    %480 = vdwg.mxu0
    %v481 = vrcp.pop %v479
    %v482 = vmul.f32 %v479, %v481
    %v483 = vsub.f32 1.0, %v482
    %v484 = vmul.f32 %v481, %v483
    %v485 = vadd.f32 %v481, %v484
    %vm486 = vweird.f32 %v479
    %vm487 = vweird.f32 %v481
    %vm488 = vmor %vm486, %vm487
    %v489 = vsel %vm488, %v481, %v485
    %v490 = vand.u32 2147483647, %v479
    %vm491 = vcmp.eq.f32.partialorder %v490, 8.507059e+37
    %v492 = vand.u32 %v479, 2147483648
    %v493 = vor.u32 1.1754944e-38, %v492
    %v494 = vsel %vm491, %v493, %v489
    %v495 = vmul.f32 %v448, %v494
    %496 = vxpose.xlu0.b32.start [1/16] %v346, 128
    %497 = vxpose.xlu0.b32.cont [2/16] 0.0, 128
    %498 = vxpose.xlu0.b32.cont [3/16] 0.0, 128
    %499 = vxpose.xlu0.b32.cont [4/16] 0.0, 128
    %500 = vxpose.xlu0.b32.cont [5/16] 0.0, 128
    %501 = vxpose.xlu0.b32.cont [6/16] 0.0, 128
    %502 = vxpose.xlu0.b32.cont [7/16] 0.0, 128
    %503 = vxpose.xlu0.b32.cont [8/16] 0.0, 128
    %504 = vxpose.xlu0.b32.cont [9/16] 0.0, 128
    %505 = vxpose.xlu0.b32.cont [10/16] 0.0, 128
    %506 = vxpose.xlu0.b32.cont [11/16] 0.0, 128
    %507 = vxpose.xlu0.b32.cont [12/16] 0.0, 128
    %508 = vxpose.xlu0.b32.cont [13/16] 0.0, 128
    %509 = vxpose.xlu0.b32.cont [14/16] 0.0, 128
    %510 = vxpose.xlu0.b32.cont [15/16] 0.0, 128
    %511 = vxpose.xlu0.b32.end [16/16] 0.0, 128
    %v512 = vpop.trf.xlu0
    %v513 = vpop.trf.xlu0
    %v514 = vpop.trf.xlu0
    %v515 = vpop.trf.xlu0
    %v516 = vpop.trf.xlu0
    %v517 = vpop.trf.xlu0
    %v518 = vpop.trf.xlu0
    %v519 = vpop.trf.xlu0
    %v520 = vpop.trf.xlu0
    %v521 = vpop.trf.xlu0
    %v522 = vpop.trf.xlu0
    %v523 = vpop.trf.xlu0
    %v524 = vpop.trf.xlu0
    %v525 = vpop.trf.xlu0
    %v526 = vpop.trf.xlu0
    %v527 = vpop.trf.xlu0
    %528 = vrot.lane.b32.xlu0 %v138, 64
    %v529 = vpop.permute.xlu0 %528
    %v532 = vsel %vm300, %v512, 0
    %v535 = vsel %vm300, %v513, 0
    %v538 = vsel %vm300, %v514, 0
    %v541 = vsel %vm300, %v515, 0
    %543 = vmatpush.msra.mxu0 0.0
    %544 = vmatpush.msra.mxu0 0.0
    %545 = vmatpush.msra.mxu0 0.0
    %546 = vmatpush.msra.mxu0 0.0
    %547 = vmatpush.msra.mxu0 0.0
    %548 = vmatpush.msra.mxu0 0.0
    %549 = vmatpush.msra.mxu0 0.0
    %550 = vmatpush.msra.mxu0 0.0
    %551 = vmatpush.msra.mxu0 0.0
    %552 = vmatpush.msra.mxu0 0.0
    %553 = vmatpush.msra.mxu0 0.0
    %554 = vmatpush.msra.mxu0 0.0
    %555 = vmatpush.msra.mxu0 0.0
    %556 = vmatpush.msra.mxu0 0.0
    %557 = vmatpush.msra.mxu0 0.0
    %558 = vmatpush.msra.mxu0 %v529
    %559 = vmatmul.f32.gmra.mxu0 %v532
    %v560 = vpop.f32.mrf.mxu0
    %v561 = vadd.f32 0.0, %v560
    %562 = vmatmul.f32.gmra.mxu0 %v535
    %v563 = vpop.f32.mrf.mxu0
    %v564 = vadd.f32 0.0, %v563
    %565 = vmatmul.f32.gmra.mxu0 %v538
    %v566 = vpop.f32.mrf.mxu0
    %v567 = vadd.f32 0.0, %v566
    %568 = vmatmul.f32.gmra.mxu0 %v541
    %v569 = vpop.f32.mrf.mxu0
    %v570 = vadd.f32 0.0, %v569
    %571 = vdwg.mxu0
    %v572 = vmul.f32 %v561, %v296
    %v573 = vmul.f32 %v564, %v297
    %v574 = vmul.f32 %v567, %v298
    %v575 = vmul.f32 %v570, %v299
    %v577 = vsel %vm110, %v308, 0
    %579 = vmatpush.msra.mxu0 0.0
    %580 = vmatpush.msra.mxu0 0.0
    %581 = vmatpush.msra.mxu0 0.0
    %582 = vmatpush.msra.mxu0 0.0
    %583 = vmatpush.msra.mxu0 0.0
    %584 = vmatpush.msra.mxu0 0.0
    %585 = vmatpush.msra.mxu0 0.0
    %586 = vmatpush.msra.mxu0 0.0
    %587 = vmatpush.msra.mxu0 0.0
    %588 = vmatpush.msra.mxu0 0.0
    %589 = vmatpush.msra.mxu0 0.0
    %590 = vmatpush.msra.mxu0 0.0
    %591 = vmatpush.msra.mxu0 %v575
    %592 = vmatpush.msra.mxu0 %v574
    %593 = vmatpush.msra.mxu0 %v573
    %594 = vmatpush.msra.mxu0 %v572
    %595 = vmatmul.f32.gmra.mxu0 %v577
    %v596 = vpop.f32.mrf.mxu0
    %v597 = vadd.f32 0.0, %v596
    %598 = vdwg.mxu0
    %v599 = vsel %vm110, %v346, 0.0
    %v600 = vrot.slane %v599, 4
    %v601 = vadd.f32 %v599, %v600
    %v602 = vrot.slane %v601, 2
    %v603 = vadd.f32 %v601, %v602
    %v604 = vrot.slane %v603, 1
    %v605 = vadd.f32 %v603, %v604
    %v606 = vmul.f32 %v308, %v605
    %v608 = vsel %vm110, %v606, 0
    %610 = vmatpush.msra.mxu0 0.0
    %611 = vmatpush.msra.mxu0 0.0
    %612 = vmatpush.msra.mxu0 0.0
    %613 = vmatpush.msra.mxu0 0.0
    %614 = vmatpush.msra.mxu0 0.0
    %615 = vmatpush.msra.mxu0 0.0
    %616 = vmatpush.msra.mxu0 0.0
    %617 = vmatpush.msra.mxu0 0.0
    %618 = vmatpush.msra.mxu0 0.0
    %619 = vmatpush.msra.mxu0 0.0
    %620 = vmatpush.msra.mxu0 0.0
    %621 = vmatpush.msra.mxu0 0.0
    %622 = vmatpush.msra.mxu0 %v299
    %623 = vmatpush.msra.mxu0 %v298
    %624 = vmatpush.msra.mxu0 %v297
    %625 = vmatpush.msra.mxu0 %v296
    %626 = vmatmul.f32.gmra.mxu0 %v608
    %v627 = vpop.f32.mrf.mxu0
    %v628 = vadd.f32 1e-06, %v627
    %629 = vdwg.mxu0
    %v630 = vrcp.pop %v628
    %v631 = vmul.f32 %v628, %v630
    %v632 = vsub.f32 1.0, %v631
    %v633 = vmul.f32 %v630, %v632
    %v634 = vadd.f32 %v630, %v633
    %vm635 = vweird.f32 %v628
    %vm636 = vweird.f32 %v630
    %vm637 = vmor %vm635, %vm636
    %v638 = vsel %vm637, %v630, %v634
    %v639 = vand.u32 2147483647, %v628
    %vm640 = vcmp.eq.f32.partialorder %v639, 8.507059e+37
    %v641 = vand.u32 %v628, 2147483648
    %v642 = vor.u32 1.1754944e-38, %v641
    %v643 = vsel %vm640, %v642, %v638
    %v644 = vmul.f32 %v597, %v643
    %v645 = vld [vmem:[#allocation7] sm:$0xff]
    %v646 = vld [vmem:[#allocation7 + $0x8] sm:$0xff]
    %v647 = vld [vmem:[#allocation7 + $0x10] sm:$0xff]
    %v648 = vld [vmem:[#allocation7 + $0x18] sm:$0xff]
    %v649 = vld [vmem:[%s4] sm:$0x1]
    %v651 = vperm.slane %v649, 0
    %v654 = vsel %vm110, %v495, 0
    %v657 = vsel %vm110, %v644, 0
    %659 = vmatpush.msra.mxu0 0.0
    %660 = vmatpush.msra.mxu0 0.0
    %661 = vmatpush.msra.mxu0 0.0
    %662 = vmatpush.msra.mxu0 0.0
    %663 = vmatpush.msra.mxu0 0.0
    %664 = vmatpush.msra.mxu0 0.0
    %665 = vmatpush.msra.mxu0 0.0
    %666 = vmatpush.msra.mxu0 0.0
    %667 = vmatpush.msra.mxu0 0.0
    %668 = vmatpush.msra.mxu0 0.0
    %669 = vmatpush.msra.mxu0 0.0
    %670 = vmatpush.msra.mxu0 0.0
    %671 = vmatpush.msra.mxu0 %v648
    %672 = vmatpush.msra.mxu0 %v647
    %673 = vmatpush.msra.mxu0 %v646
    %674 = vmatpush.msra.mxu0 %v645
    %675 = vmatmul.f32.gmra.mxu0 %v654
    %v676 = vpop.f32.mrf.mxu0
    %v677 = vadd.f32 %v651, %v676
    %678 = vmatmul.f32.gmra.mxu0 %v657
    %v679 = vpop.f32.mrf.mxu0
    %v680 = vadd.f32 %v651, %v679
    %681 = vdwg.mxu0
    %682 = vst.msk [vmem:[#allocation11] sm:$0xff] %vm110, %v677
    %683 = vst.msk [vmem:[#allocation11 + $0x8] sm:$0xff] %vm110, %v680
    // Predicated region
    $region46: #{linear_attention.1} parent=1 // pred_check
      _
    $region47: #{linear_attention.1} parent=1 // pred_check_branch
      %685 = sbr.rel (0) target = $region49
    $region48: #{linear_attention.1} parent=1 // pred_region
      %687 = vsyncadd [#allocation4], 0
      %s688 = sshll.u32 [#allocation11], 4
      %s689 = int_to_ptr.vmem [resolvable:$true] %s688
      %s690 = sshll.u32 %s6, 4
      %s691 = int_to_ptr.hbm [resolvable:$true] %s690
      %696 = dma.vmem_to_hbm [thread:$0]  %s689, 256, %s691, [#allocation4], 128, 128, 8
    $region49: #{linear_attention.1} parent=1 // pred_fallthru
      _
    // Predicated region
    $region50: #{linear_attention.1} parent=1 // pred_check
      _
    $region51: #{linear_attention.1} parent=1 // pred_check_branch
      %698 = sbr.rel (0) target = $region53
    $region52: #{linear_attention.1} parent=1 // pred_region
      %700 = dma.done [#allocation4], 256
    $region53: #{linear_attention.1} parent=1 // pred_fallthru
      _
    %701 = vsyncpa [#allocation3], 1
    %702 = vsyncpa [#allocation6], 1
    %703 = vsyncpa [#allocation9], 1
    %704 = vsyncpa [#allocation4], 1

</llo_original>
